<compile_context>
chip_gen: v7x
topology: tpu7x:2x2x1
jax: 0.10.0
libtpu: 0.0.40
codegen_flags: <defaults>
</compile_context>

<pallas_src>
import functools

import jax
import jax.numpy as jnp
from jax import lax
from jax.experimental import pallas as pl
from jax.experimental.pallas import tpu as pltpu

LANE = 128
SUBLANE = 8
TN_MAX = 512          # rows processed per grid step (256-1024 fits all chips)
VMEM_LIMIT = 32 * 1024 * 1024   # safe on v5e/v6e (128 MiB) and v7x (64 MiB)


def _round_up(x, m):
    return (x + m - 1) // m * m


def bigram_train_kernel(it_ref, table_ref, logits_ref, loss_ref, *, vocab_size):
    """One grid step over TN rows.

    it_ref:     (TN, 2)  int32 — packed [idx, tgt] per row (tgt == -1 => padded row)
    table_ref:  (Vp, Vp) f32   — zero-padded embedding table (resident across grid)
    logits_ref: (TN, Vp) f32   — lane-dense logits tile
    loss_ref:   (1, 8, 128) f32 — per-block partial NLL sum (broadcast-filled)
    """
    TN = it_ref.shape[0]
    Vp = table_ref.shape[1]

    idx = it_ref[:, 0:1]                                     # (TN, 1)
    tgt = it_ref[:, 1:2]                                     # (TN, 1)

    col = lax.broadcasted_iota(jnp.int32, (TN, Vp), 1)       # (TN, Vp)

    # Embedding lookup == one-hot(idx) @ table on the MXU.  One-hot is exactly
    # representable and the table stays f32, so the lookup is exact.
    onehot_idx = (col == idx).astype(jnp.float32)
    logits = jnp.dot(onehot_idx, table_ref[...],
                     preferred_element_type=jnp.float32)     # (TN, Vp)
    logits_ref[...] = logits

    # Cross entropy without materializing a (TN, Vp) log-prob tensor:
    #   nll = (m + log-sum-exp) - logits[target]
    # Padded vocab columns are masked out of the softmax; padded rows
    # (tgt == -1) contribute 0.
    masked = jnp.where(col < vocab_size, logits, -1e30)
    m = jnp.max(masked, axis=-1, keepdims=True)              # (TN, 1)
    lse = jnp.log(jnp.sum(jnp.exp(masked - m), axis=-1, keepdims=True))
    tgt_logit = jnp.sum((col == tgt).astype(jnp.float32) * logits,
                        axis=-1, keepdims=True)              # (TN, 1)
    nll = jnp.where(tgt >= 0, (m + lse) - tgt_logit, 0.0)    # (TN, 1)

    loss_ref[...] = jnp.full(loss_ref.shape, jnp.sum(nll), dtype=loss_ref.dtype)


def bigram_logits_kernel(idx_ref, table_ref, logits_ref):
    """Inference path: embedding lookup only, no cross-entropy epilogue."""
    TN = idx_ref.shape[0]
    Vp = table_ref.shape[1]
    col = lax.broadcasted_iota(jnp.int32, (TN, Vp), 1)
    onehot = (col == idx_ref[:, 0:1]).astype(jnp.float32)
    logits_ref[...] = jnp.dot(onehot, table_ref[...],
                              preferred_element_type=jnp.float32)


def _pad_table(table):
    V = table.shape[0]
    Vp = _round_up(V, LANE)
    if table.dtype != jnp.float32:          # only convert if actually needed
        table = table.astype(jnp.float32)
    return jnp.pad(table, ((0, Vp - V), (0, Vp - V))), V, Vp


def bigram_forward(indx, targets, table):
    """Forward pass with targets.

    indx, targets: (B, T) int token ids;  table: (V, V) float32.
    Returns (logits of shape (B*T, V), scalar mean cross-entropy loss) — same
    as the PyTorch forward when targets is not None.
    """
    B, T = indx.shape
    N = B * T
    table_p, V, Vp = _pad_table(table)

    TN = min(TN_MAX, _round_up(N, SUBLANE))
    N_pad = _round_up(N, TN)
    grid_n = N_pad // TN

    idx_flat = indx.reshape(-1).astype(jnp.int32)
    tgt_flat = targets.reshape(-1).astype(jnp.int32)
    idx_p = jnp.pad(idx_flat, (0, N_pad - N))                      # 0 is a valid id
    tgt_p = jnp.pad(tgt_flat, (0, N_pad - N), constant_values=-1)  # sentinel -> masked
    it = jnp.stack([idx_p, tgt_p], axis=-1)                        # (N_pad, 2) int32

    kernel = functools.partial(bigram_train_kernel, vocab_size=V)
    logits_pad, loss_part = pl.pallas_call(
        kernel,
        grid=(grid_n,),
        in_specs=[
            pl.BlockSpec((TN, 2), lambda i: (i, 0)),       # packed idx/tgt rows
            pl.BlockSpec((Vp, Vp), lambda i: (0, 0)),      # table resident in VMEM
        ],
        out_specs=(
            pl.BlockSpec((TN, Vp), lambda i: (i, 0)),              # lane-dense logits
            pl.BlockSpec((1, SUBLANE, LANE), lambda i: (i, 0, 0)),  # per-block loss
        ),
        out_shape=(
            jax.ShapeDtypeStruct((N_pad, Vp), jnp.float32),
            jax.ShapeDtypeStruct((grid_n, SUBLANE, LANE), jnp.float32),
        ),
        compiler_params=pltpu.CompilerParams(
            dimension_semantics=("parallel",),
            vmem_limit_bytes=VMEM_LIMIT),
    )(it, table_p)

    logits = logits_pad[:N, :V]
    loss = jnp.sum(loss_part[:, 0, 0]) / N
    return logits, loss


def bigram_logits_only(indx, table):
    """Forward pass when targets is None: returns (B, T, V) logits, loss=None."""
    B, T = indx.shape
    N = B * T
    table_p, V, Vp = _pad_table(table)

    TN = min(TN_MAX, _round_up(N, SUBLANE))
    N_pad = _round_up(N, TN)
    grid_n = N_pad // TN

    idx_p = jnp.pad(indx.reshape(-1).astype(jnp.int32), (0, N_pad - N))[:, None]

    logits_pad = pl.pallas_call(
        bigram_logits_kernel,
        grid=(grid_n,),
        in_specs=[
            pl.BlockSpec((TN, 1), lambda i: (i, 0)),
            pl.BlockSpec((Vp, Vp), lambda i: (0, 0)),
        ],
        out_specs=pl.BlockSpec((TN, Vp), lambda i: (i, 0)),
        out_shape=jax.ShapeDtypeStruct((N_pad, Vp), jnp.float32),
        compiler_params=pltpu.CompilerParams(
            dimension_semantics=("parallel",),
            vmem_limit_bytes=VMEM_LIMIT),
    )(idx_p, table_p)

    return logits_pad[:N, :V].reshape(B, T, V), None


# TODO(synk): generate() uses torch.multinomial sampling in a stateful Python
# loop (autoregressive concat + RNG); not implemented as a Pallas kernel here.


def _reference(indx, targets, table):
    logits = table[indx.reshape(-1)]                          # (B*T, V)
    tgt = targets.reshape(-1)
    logp = jax.nn.log_softmax(logits, axis=-1)
    nll = -jnp.take_along_axis(logp, tgt[:, None], axis=-1)[:, 0]
    return logits, jnp.mean(nll)


if __name__ == "__main__":
    key = jax.random.PRNGKey(0)
    k_tab, k_idx, k_tgt = jax.random.split(key, 3)

    vocab_size = 65   # e.g. tiny-shakespeare character vocab
    B, T = 2, 8

    # nn.Embedding default init: N(0, 1)
    table = jax.random.normal(k_tab, (vocab_size, vocab_size), dtype=jnp.float32)
    indx = jax.random.randint(k_idx, (B, T), 0, vocab_size, dtype=jnp.int32)
    targets = jax.random.randint(k_tgt, (B, T), 0, vocab_size, dtype=jnp.int32)

    # Training path (targets given): logits (B*T, V) + scalar loss.
    logits, loss = bigram_forward(indx, targets, table)
    logits = jax.block_until_ready(logits)
    loss = jax.block_until_ready(loss)

    ref_logits, ref_loss = _reference(indx, targets, table)
    assert logits.shape == (B * T, vocab_size)
    assert jnp.allclose(logits, ref_logits, atol=1e-5, rtol=1e-5)
    assert jnp.allclose(loss, ref_loss, atol=1e-5, rtol=1e-5)

    # Inference path (targets=None): logits (B, T, V), no loss.
    logits3, no_loss = bigram_logits_only(indx, table)
    logits3 = jax.block_until_ready(logits3)
    assert no_loss is None
    assert logits3.shape == (B, T, vocab_size)
    assert jnp.allclose(logits3.reshape(B * T, vocab_size), ref_logits,
                        atol=1e-5, rtol=1e-5)

    print("KERNEL_OK")
</pallas_src>

<mosaic_0001>
module attributes {stable_mosaic.version = 11 : i64} {
  func.func @bigram_train_kernel(%arg0: i32, %arg1: memref<16x2xi32, #tpu.memory_space<vmem>>, %arg2: memref<128x128xf32, #tpu.memory_space<vmem>>, %arg3: memref<16x128xf32, #tpu.memory_space<vmem>>, %arg4: memref<1x8x128xf32, #tpu.memory_space<vmem>>) attributes {dimension_semantics = [#tpu.dimension_semantics<parallel>], iteration_bounds = array<i64: 1>, scalar_prefetch = 0 : i64, scratch_operands = 0 : i64, tpu.core_type = #tpu.core_type<tc>, window_params = [{transform_indices = @transform_0, window_bounds = array<i64: 16, 2>}, {pipeline_mode = #tpu.pipeline_mode<synchronous>, transform_indices = @transform_1, window_bounds = array<i64: 128, 128>}, {transform_indices = @transform_2, window_bounds = array<i64: 16, 128>}, {transform_indices = @transform_3, window_bounds = array<i64: 1, 8, 128>}]} {
    %c0 = arith.constant 0 : index
    %c0_0 = arith.constant 0 : index
    %0 = vector.load %arg1[%c0, %c0_0] : memref<16x2xi32, #tpu.memory_space<vmem>>, vector<16x1xi32>
    %c0_1 = arith.constant 0 : index
    %c1 = arith.constant 1 : index
    %1 = vector.load %arg1[%c0_1, %c1] : memref<16x2xi32, #tpu.memory_space<vmem>>, vector<16x1xi32>
    %2 = tpu.iota {dimensions = array<i32: 1>} : vector<16x128xi32>
    %3 = vector.broadcast %0 : vector<16x1xi32> to vector<16x128xi32>
    %4 = arith.cmpi eq, %2, %3 : vector<16x128xi32>
    %5 = arith.extui %4 : vector<16x128xi1> to vector<16x128xi32>
    %6 = arith.sitofp %5 : vector<16x128xi32> to vector<16x128xf32>
    %c0_2 = arith.constant 0 : index
    %c0_3 = arith.constant 0 : index
    %7 = vector.load %arg2[%c0_2, %c0_3] : memref<128x128xf32, #tpu.memory_space<vmem>>, vector<128x128xf32>
    %cst = arith.constant dense<0.000000e+00> : vector<16x128xf32>
    %8 = tpu.matmul %6, %7, %cst {dimension_numbers = #tpu.dot_dimension_numbers<[1], [0], [0], [1], [0, 0, 1, 1], [], []>} : vector<16x128xf32>, vector<128x128xf32>, vector<16x128xf32> -> vector<16x128xf32>
    %c0_4 = arith.constant 0 : index
    %c0_5 = arith.constant 0 : index
    %9 = vector.load %arg3[%c0_4, %c0_5] : memref<16x128xf32, #tpu.memory_space<vmem>>, vector<16x128xf32>
    tpu.vector_store %arg3[%c0_4, %c0_5], %8 {strides = array<i32>} : memref<16x128xf32, #tpu.memory_space<vmem>>, vector<16x128xf32>,
    %c65_i32 = arith.constant 65 : i32
    %10 = vector.broadcast %c65_i32 : i32 to vector<16x128xi32>
    %11 = arith.cmpi slt, %2, %10 : vector<16x128xi32>
    %cst_6 = arith.constant -1.000000e+30 : f32
    %12 = vector.broadcast %cst_6 : f32 to vector<16x128xf32>
    %13 = arith.select %11, %8, %12 : vector<16x128xi1>, vector<16x128xf32>
    %cst_7 = arith.constant dense<0xFF800000> : vector<16xf32>
    %14 = vector.multi_reduction <maximumf>, %13, %cst_7 [1] : vector<16x128xf32> to vector<16xf32>
    %15 = vector.shape_cast %14 : vector<16xf32> to vector<16x1xf32>
    %16 = vector.broadcast %15 : vector<16x1xf32> to vector<16x128xf32>
    %17 = arith.subf %13, %16 : vector<16x128xf32>
    %18 = math.exp %17 : vector<16x128xf32>
    %cst_8 = arith.constant dense<0.000000e+00> : vector<16xf32>
    %19 = vector.multi_reduction <add>, %18, %cst_8 [1] : vector<16x128xf32> to vector<16xf32>
    %20 = vector.shape_cast %19 : vector<16xf32> to vector<16x1xf32>
    %21 = math.log %20 : vector<16x1xf32>
    %22 = vector.broadcast %1 : vector<16x1xi32> to vector<16x128xi32>
    %23 = arith.cmpi eq, %2, %22 : vector<16x128xi32>
    %24 = arith.extui %23 : vector<16x128xi1> to vector<16x128xi32>
    %25 = arith.sitofp %24 : vector<16x128xi32> to vector<16x128xf32>
    %26 = arith.mulf %25, %8 : vector<16x128xf32>
    %cst_9 = arith.constant dense<0.000000e+00> : vector<16xf32>
    %27 = vector.multi_reduction <add>, %26, %cst_9 [1] : vector<16x128xf32> to vector<16xf32>
    %28 = vector.shape_cast %27 : vector<16xf32> to vector<16x1xf32>
    %c0_i32 = arith.constant 0 : i32
    %29 = vector.broadcast %c0_i32 : i32 to vector<16x1xi32>
    %30 = arith.cmpi sge, %1, %29 : vector<16x1xi32>
    %31 = arith.addf %15, %21 : vector<16x1xf32>
    %32 = arith.subf %31, %28 : vector<16x1xf32>
    %cst_10 = arith.constant 0.000000e+00 : f32
    %33 = vector.broadcast %cst_10 : f32 to vector<16x1xf32>
    %34 = arith.select %30, %32, %33 : vector<16x1xi1>, vector<16x1xf32>
    %35 = vector.shape_cast %34 : vector<16x1xf32> to vector<1x16x1xf32>
    %cst_11 = arith.constant dense<0.000000e+00> : vector<1xf32>
    %36 = vector.multi_reduction <add>, %35, %cst_11 [1, 2] : vector<1x16x1xf32> to vector<1xf32>
    %37 = vector.shape_cast %36 : vector<1xf32> to vector<1x1x1xf32>
    %38 = vector.extract %37[0, 0, 0] : f32 from vector<1x1x1xf32>
    %39 = vector.broadcast %38 : f32 to vector<1x8x128xf32>
    %c0_12 = arith.constant 0 : index
    %c0_13 = arith.constant 0 : index
    %c0_14 = arith.constant 0 : index
    %40 = vector.load %arg4[%c0_12, %c0_13, %c0_14] : memref<1x8x128xf32, #tpu.memory_space<vmem>>, vector<1x8x128xf32>
    tpu.vector_store %arg4[%c0_12, %c0_13, %c0_14], %39 {strides = array<i32>} : memref<1x8x128xf32, #tpu.memory_space<vmem>>, vector<1x8x128xf32>,
    return
  }
  func.func @transform_0(%arg0: i32) -> (i32, i32) {
    %c0_i32 = arith.constant 0 : i32
    %c0_i32_0 = arith.constant 0 : i32
    return %arg0, %c0_i32 : i32, i32
  }
  func.func @transform_1(%arg0: i32) -> (i32, i32) {
    %c0_i32 = arith.constant 0 : i32
    %c0_i32_0 = arith.constant 0 : i32
    %c0_i32_1 = arith.constant 0 : i32
    return %c0_i32, %c0_i32_0 : i32, i32
  }
  func.func @transform_2(%arg0: i32) -> (i32, i32) {
    %c0_i32 = arith.constant 0 : i32
    %c0_i32_0 = arith.constant 0 : i32
    return %arg0, %c0_i32 : i32, i32
  }
  func.func @transform_3(%arg0: i32) -> (i32, i32, i32) {
    %c0_i32 = arith.constant 0 : i32
    %c0_i32_0 = arith.constant 0 : i32
    %c0_i32_1 = arith.constant 0 : i32
    return %arg0, %c0_i32, %c0_i32_0 : i32, i32, i32
  }
}

</mosaic_0001>

<llo_original>
// kernel: tpu_custom_call.1
$region0: #{tpu_custom_call.1}
  #allocation0 [shape = 'u32[]', space=smem, size = 0x4, offset = 0x4, fixed_abs, tag = 'smem constant byte address 0x4 - core index']
  #allocation1 [shape = 'u32[144,128]{1,0:T(1,128)}', space=vmem, size = 0x12000, scoped, tag = 'internal scratch']
  %s0 = inlined_call_operand.vmem [shape: s32[16,2], index: 0, kind: input, shape index: {}]
  %s1 = inlined_call_operand.hbm [shape: f32[128,128], index: 1, kind: input, shape index: {}]
  %s2 = inlined_call_operand.hbm [shape: f32[16,128], index: 2, kind: output, shape index: {0}]
  %s3 = inlined_call_operand.hbm [shape: f32[1,8,128], index: 3, kind: output, shape index: {1}]
  %4 = xla_tuple %s2, %s3
  %s5 = sld [smem:[#allocation0]]
  $region30: #{tpu_custom_call.1} parent=0
    _
  %s7 = ssub.s32 1, %s5
  %s8 = scalar_select 0, %s7, %s5
  $region1: #{tpu_custom_call.1} parent=0
    #allocation2 [shape = 'u8[65536]{0}', space=vmem, size = 0x10000, scoped, tag = 'input window, operand 1, single buffered']
    #allocation3 [shape = 's32[1]{0}', space=sflag, size = 0x4, scoped, tag = 'scoped memory for tpu_custom_call.1']
    #allocation4 [shape = 's32[1]{0}', space=sflag, size = 0x4, scoped, tag = 'scoped memory for tpu_custom_call.1']
    #allocation5 [shape = 'u8[8192]{0}', space=vmem, size = 0x2000, scoped, tag = 'output window, operand 0, single buffered']
    #allocation6 [shape = 'u8[4096]{0}', space=vmem, size = 0x1000, scoped, tag = 'output window, operand 1, single buffered']
    #allocation7 [shape = 's32[1]{0}', space=sflag, size = 0x4, scoped, tag = 'scoped memory for tpu_custom_call.1']
    %9 = vsyncpa [#allocation3], 0
    %10 = vsyncpa [#allocation4], 0
    %11 = vsyncpa [#allocation7], 0
    // Predicated region
    $region2: #{tpu_custom_call.1} parent=1 // pred_check
      _
    $region3: #{tpu_custom_call.1} parent=1 // pred_check_branch
      %13 = sbr.rel (0) target = $region5
    $region4: #{tpu_custom_call.1} parent=1 // pred_region
      _
    $region5: #{tpu_custom_call.1} parent=1 // pred_fallthru
      _
    // Predicated region
    $region6: #{tpu_custom_call.1} parent=1 // pred_check
      _
    $region7: #{tpu_custom_call.1} parent=1 // pred_check_branch
      %15 = sbr.rel (0) target = $region9
    $region8: #{tpu_custom_call.1} parent=1 // pred_region
      %s17 = ssub.s32 2048, 2048
      %18 = vsyncadd [#allocation3], %s17
      %s19 = sshll.u32 [#allocation2], 4
      %s20 = int_to_ptr.vmem [resolvable:$true] %s19
      %25 = dma.hbm_to_vmem [thread:$0]  %s1, 2048, %s20, [#allocation3], 128, 128, 8
    $region9: #{tpu_custom_call.1} parent=1 // pred_fallthru
      _
    // Predicated region
    $region10: #{tpu_custom_call.1} parent=1 // pred_check
      _
    $region11: #{tpu_custom_call.1} parent=1 // pred_check_branch
      %27 = sbr.rel (0) target = $region13
    $region12: #{tpu_custom_call.1} parent=1 // pred_region
      %28 = dma.done [#allocation3], 2048
    $region13: #{tpu_custom_call.1} parent=1 // pred_fallthru
      _
    %v29 = vld [vmem:[%s0] sm:$0xff]
    %v30 = vld [vmem:[%s0 + $0x8] sm:$0xff]
    %v31 = vlaneseq
    %v32 = vand.u32 %v31, 127
    %33 = vset.pattern.permute.xlu0 0
    %34 = vperm.xlu0 %33, %v29
    %v35 = vpop.permute.xlu0 %34
    %36 = vset.pattern.permute.xlu0 0
    %37 = vperm.xlu0 %36, %v30
    %v38 = vpop.permute.xlu0 %37
    %vm39 = vcmp.eq.s32.totalorder %v32, %v35
    %vm40 = vcmp.eq.s32.totalorder %v32, %v38
    %v41 = vsel %vm39, 1, 0
    %v42 = vsel %vm40, 1, 0
    %v43 = vcvt.s32.f32 %v41
    %v44 = vcvt.s32.f32 %v42
    %v45 = vld [vmem:[#allocation2] sm:$0xff]
    %v46 = vld [vmem:[#allocation2 + $0x8] sm:$0xff]
    %v47 = vld [vmem:[#allocation2 + $0x10] sm:$0xff]
    %v48 = vld [vmem:[#allocation2 + $0x18] sm:$0xff]
    %v49 = vld [vmem:[#allocation2 + $0x20] sm:$0xff]
    %v50 = vld [vmem:[#allocation2 + $0x28] sm:$0xff]
    %v51 = vld [vmem:[#allocation2 + $0x30] sm:$0xff]
    %v52 = vld [vmem:[#allocation2 + $0x38] sm:$0xff]
    %v53 = vld [vmem:[#allocation2 + $0x40] sm:$0xff]
    %v54 = vld [vmem:[#allocation2 + $0x48] sm:$0xff]
    %v55 = vld [vmem:[#allocation2 + $0x50] sm:$0xff]
    %v56 = vld [vmem:[#allocation2 + $0x58] sm:$0xff]
    %v57 = vld [vmem:[#allocation2 + $0x60] sm:$0xff]
    %v58 = vld [vmem:[#allocation2 + $0x68] sm:$0xff]
    %v59 = vld [vmem:[#allocation2 + $0x70] sm:$0xff]
    %v60 = vld [vmem:[#allocation2 + $0x78] sm:$0xff]
    %61 = vmatprep.subr.mxu0 0.0
    %62 = vmatpush1.msra.mxu0 %v45
    %63 = vmatprep.subr.mxu0 0.0
    %64 = vmatpush1.msra.mxu0 %v46
    %65 = vmatprep.subr.mxu0 0.0
    %66 = vmatpush1.msra.mxu0 %v47
    %67 = vmatprep.subr.mxu0 0.0
    %68 = vmatpush1.msra.mxu0 %v48
    %69 = vmatprep.subr.mxu0 0.0
    %70 = vmatpush1.msra.mxu0 %v49
    %71 = vmatprep.subr.mxu0 0.0
    %72 = vmatpush1.msra.mxu0 %v50
    %73 = vmatprep.subr.mxu0 0.0
    %74 = vmatpush1.msra.mxu0 %v51
    %75 = vmatprep.subr.mxu0 0.0
    %76 = vmatpush1.msra.mxu0 %v52
    %77 = vmatprep.subr.mxu0 0.0
    %78 = vmatpush1.msra.mxu0 %v53
    %79 = vmatprep.subr.mxu0 0.0
    %80 = vmatpush1.msra.mxu0 %v54
    %81 = vmatprep.subr.mxu0 0.0
    %82 = vmatpush1.msra.mxu0 %v55
    %83 = vmatprep.subr.mxu0 0.0
    %84 = vmatpush1.msra.mxu0 %v56
    %85 = vmatprep.subr.mxu0 0.0
    %86 = vmatpush1.msra.mxu0 %v57
    %87 = vmatprep.subr.mxu0 0.0
    %88 = vmatpush1.msra.mxu0 %v58
    %89 = vmatprep.subr.mxu0 0.0
    %90 = vmatpush1.msra.mxu0 %v59
    %91 = vmatprep.subr.mxu0 0.0
    %92 = vmatpush1.msra.mxu0 %v60
    %93 = vmatprep.subr.mxu0 0.0
    %94 = vmatpush1.msra.mxu0 0.0
    %95 = vmatprep.subr.mxu0 0.0
    %96 = vmatpush1.msra.mxu0 0.0
    %97 = vmatprep.subr.mxu0 0.0
    %98 = vmatpush1.msra.mxu0 0.0
    %99 = vmatprep.subr.mxu0 0.0
    %100 = vmatpush1.msra.mxu0 0.0
    %101 = vmatprep.subr.mxu0 0.0
    %102 = vmatpush1.msra.mxu0 0.0
    %103 = vmatprep.subr.mxu0 0.0
    %104 = vmatpush1.msra.mxu0 0.0
    %105 = vmatprep.subr.mxu0 0.0
    %106 = vmatpush1.msra.mxu0 0.0
    %107 = vmatprep.subr.mxu0 0.0
    %108 = vmatpush1.msra.mxu0 0.0
    %109 = vmatprep.subr.mxu0 0.0
    %110 = vmatpush1.msra.mxu0 0.0
    %111 = vmatprep.subr.mxu0 0.0
    %112 = vmatpush1.msra.mxu0 0.0
    %113 = vmatprep.subr.mxu0 0.0
    %114 = vmatpush1.msra.mxu0 0.0
    %115 = vmatprep.subr.mxu0 0.0
    %116 = vmatpush1.msra.mxu0 0.0
    %117 = vmatprep.subr.mxu0 0.0
    %118 = vmatpush1.msra.mxu0 0.0
    %119 = vmatprep.subr.mxu0 0.0
    %120 = vmatpush1.msra.mxu0 0.0
    %121 = vmatprep.subr.mxu0 0.0
    %122 = vmatpush1.msra.mxu0 0.0
    %123 = vmatprep.subr.mxu0 0.0
    %124 = vmatpush1.msra.mxu0 0.0
    %125 = vmatprep.mubr.f32.mxu0 0.0
    %126 = vmatmul.mubr.f32.gmra.mrb[0].mxu0 %v43
    %v127 = vpop.f32.mrb[0].mxu0
    %v128 = vadd.f32 0.0, %v127
    %v129 = vpop.f32.mrb[0].mxu0
    %130 = vmatprep.mubr.f32.mxu0 0.0
    %131 = vmatmul.mubr.f32.gmra.mrb[0].mxu0 %v44
    %v132 = vpop.f32.mrb[0].mxu0
    %v133 = vadd.f32 0.0, %v132
    %v134 = vpop.f32.mrb[0].mxu0
    %135 = vdwg.mxu0
    %136 = vst [vmem:[#allocation5] sm:$0xff] %v128
    %137 = vst [vmem:[#allocation5 + $0x8] sm:$0xff] %v133
    %vm138 = vcmp.lt.s32.totalorder %v32, 65
    %v139 = vsel %vm138, %v128, -1e+30
    %v140 = vsel %vm138, %v133, -1e+30
    %141 = vmax.xlane.f32.xlu0 %v139
    %v142 = vpop.xlane.xlu0 %141
    %143 = vmax.xlane.f32.xlu0 %v140
    %v144 = vpop.xlane.xlu0 %143
    %v145 = vsub.f32 %v139, %v142
    %v146 = vsub.f32 %v140, %v144
    %v147 = vmul.f32 %v145, 1.442695
    %v148 = vpow.pop %v147
    %v149 = vmul.f32 %v146, 1.442695
    %v150 = vpow.pop %v149
    %151 = vadd.xlane.f32.xlu0 %v148
    %v152 = vpop.xlane.xlu0 %151
    %153 = vadd.xlane.f32.xlu0 %v150
    %v154 = vpop.xlane.xlu0 %153
    %v155 = vlog2.pop %v152
    %v156 = vmul.f32 %v155, 0.6931472
    %v157 = vlog2.pop %v154
    %v158 = vmul.f32 %v157, 0.6931472
    %159 = vset.pattern.permute.xlu0 1
    %160 = vperm.xlu0 %159, %v29
    %v161 = vpop.permute.xlu0 %160
    %162 = vset.pattern.permute.xlu0 1
    %163 = vperm.xlu0 %162, %v30
    %v164 = vpop.permute.xlu0 %163
    %vm165 = vcmp.eq.s32.totalorder %v32, %v161
    %vm166 = vcmp.eq.s32.totalorder %v32, %v164
    %v167 = vsel %vm165, 1, 0
    %v168 = vsel %vm166, 1, 0
    %v169 = vcvt.s32.f32 %v167
    %v170 = vcvt.s32.f32 %v168
    %v171 = vmul.f32 %v169, %v128
    %v172 = vmul.f32 %v170, %v133
    %173 = vadd.xlane.f32.xlu0 %v171
    %v174 = vpop.xlane.xlu0 %173
    %175 = vadd.xlane.f32.xlu0 %v172
    %v176 = vpop.xlane.xlu0 %175
    %vm177 = vcmp.ge.s32.totalorder %v29, 0
    %vm178 = vcmp.ge.s32.totalorder %v30, 0
    %v179 = vadd.f32 %v142, %v156
    %v180 = vadd.f32 %v144, %v158
    %v181 = vsub.f32 %v179, %v174
    %v182 = vsub.f32 %v180, %v176
    %v183 = vsel %vm177, %v181, 0.0
    %v184 = vsel %vm178, %v182, 0.0
    %187 = vrot.lane.b32.xlu0 %v183, 127
    %v188 = vpop.permute.xlu0 %187
    %189 = vrot.lane.b32.xlu0 %v184, 127
    %v190 = vpop.permute.xlu0 %189
    %vm193 = vcmask 7168
    %v194 = vsel %vm193, %v188, 0.0
    %v195 = vsel %vm193, %v190, 0.0
    %v196 = vadd.f32 %v194, %v195
    %197 = vadd.xlane.f32.xlu0 %v196
    %v198 = vpop.xlane.xlu0 %197
    %v199 = vrot.slane %v198, 4
    %v200 = vadd.f32 %v198, %v199
    %v201 = vrot.slane %v200, 2
    %v202 = vadd.f32 %v200, %v201
    %v203 = vrot.slane %v202, 1
    %v204 = vadd.f32 %v202, %v203
    %s205 = vtos %v204
    %v206 = vstv %s205
    %207 = vst [vmem:[#allocation6] sm:$0xff] %v206
    // Predicated region
    $region14: #{tpu_custom_call.1} parent=1 // pred_check
      _
    $region15: #{tpu_custom_call.1} parent=1 // pred_check_branch
      %209 = sbr.rel (0) target = $region17
    $region16: #{tpu_custom_call.1} parent=1 // pred_region
      %s211 = ssub.s32 256, 256
      %212 = vsyncadd [#allocation4], %s211
      %s213 = sshll.u32 [#allocation5], 4
      %s214 = int_to_ptr.vmem [resolvable:$true] %s213
      %219 = dma.vmem_to_hbm [thread:$0]  %s214, 256, %s2, [#allocation4], 128, 128, 8
    $region17: #{tpu_custom_call.1} parent=1 // pred_fallthru
      _
    // Predicated region
    $region18: #{tpu_custom_call.1} parent=1 // pred_check
      _
    $region19: #{tpu_custom_call.1} parent=1 // pred_check_branch
      %221 = sbr.rel (0) target = $region21
    $region20: #{tpu_custom_call.1} parent=1 // pred_region
      %s223 = ssub.s32 128, 128
      %224 = vsyncadd [#allocation7], %s223
      %s226 = sshll.u32 [#allocation6], 4
      %s227 = int_to_ptr.vmem [resolvable:$true] %s226
      %229 = dma.vmem_to_hbm [thread:$0]  %s227, 128, %s3, [#allocation7]
    $region21: #{tpu_custom_call.1} parent=1 // pred_fallthru
      _
    // Predicated region
    $region22: #{tpu_custom_call.1} parent=1 // pred_check
      _
    $region23: #{tpu_custom_call.1} parent=1 // pred_check_branch
      %231 = sbr.rel (0) target = $region25
    $region24: #{tpu_custom_call.1} parent=1 // pred_region
      %232 = dma.done [#allocation4], 256
    $region25: #{tpu_custom_call.1} parent=1 // pred_fallthru
      _
    // Predicated region
    $region26: #{tpu_custom_call.1} parent=1 // pred_check
      _
    $region27: #{tpu_custom_call.1} parent=1 // pred_check_branch
      %234 = sbr.rel (0) target = $region29
    $region28: #{tpu_custom_call.1} parent=1 // pred_region
      %235 = dma.done [#allocation7], 128
    $region29: #{tpu_custom_call.1} parent=1 // pred_fallthru
      _
    %236 = vsyncpa [#allocation3], 1
    %237 = vsyncpa [#allocation4], 1
    %238 = vsyncpa [#allocation7], 1

</llo_original>
